<compile_context>
chip_gen: v7x
topology: tpu7x:2x2x1
jax: 0.10.0
libtpu: 0.0.40
codegen_flags: <defaults>
</compile_context>

<pallas_src>
import jax
import jax.numpy as jnp
from jax.experimental import pallas as pl
from jax.experimental.pallas import tpu as pltpu

_LANE = 128
_SUBLANE = 8


def _round_up(n, m):
    return ((n + m - 1) // m) * m


def _syslog_kernel(x_ref, w1_ref, b1_ref, w2_ref, b2_ref, o_ref):
    # x_ref:  (TB, F)    current batch tile
    # w1_ref: (F, Hp)    b1_ref: (1, Hp)
    # w2_ref: (Hp, C)    b2_ref: (1, C)      (C = real NUM_CLASSES, unpadded)
    # o_ref:  (TB, C)
    x = x_ref[...]

    # Linear 1 + ReLU (MXU matmul, f32 accumulation, lane-dense Hp = 128).
    h = jnp.dot(x, w1_ref[...], preferred_element_type=jnp.float32) + b1_ref[...]
    h = jnp.maximum(h, 0.0)

    # Linear 2: narrow (Hp, C) weights -> logits over the real classes only.
    z = jnp.dot(h, w2_ref[...], preferred_element_type=jnp.float32) + b2_ref[...]

    # LogSoftmax over the class axis, numerically stable.
    z_max = jnp.max(z, axis=-1, keepdims=True)
    z_shift = z - z_max
    lse = jnp.log(jnp.sum(jnp.exp(z_shift), axis=-1, keepdims=True))
    o_ref[...] = (z_shift - lse).astype(o_ref.dtype)


def prepare_params(w1, b1, w2, b2):
    """Pad the parameters once (hoisted out of the per-call path).

    w1: (F, H); b1: (H,); w2: (H, C); b2: (C,)  ->  kernel-ready f32 arrays
    with the hidden dim zero-padded to a lane-dense multiple of 128.  The
    class dim is left at its real size (no -1e30 sentinels needed).
    """
    F, H = w1.shape
    C = w2.shape[1]
    Hp = _round_up(max(H, _LANE), _LANE)

    w1_p = jnp.zeros((F, Hp), jnp.float32).at[:, :H].set(w1.astype(jnp.float32))
    b1_p = jnp.zeros((1, Hp), jnp.float32).at[:, :H].set(
        b1.astype(jnp.float32).reshape(1, H))
    # Padded hidden rows of w2 must be exactly zero so dead hidden lanes
    # contribute nothing to the logits.
    w2_p = jnp.zeros((Hp, C), jnp.float32).at[:H, :].set(w2.astype(jnp.float32))
    b2_p = b2.astype(jnp.float32).reshape(1, C)
    return w1_p, b1_p, w2_p, b2_p


def syslog_forward(x, params, *, batch_tile=1024):
    """x: (B, F); params from prepare_params() -> (B, C) f32 log-probs."""
    w1_p, b1_p, w2_p, b2_p = params
    B, F = x.shape
    Hp = w1_p.shape[1]
    C = w2_p.shape[1]

    # ---- Balanced batch tiling: minimal number of grid steps at the cap,
    #      then spread rows evenly so total padding stays < 8 rows per step.
    cap = max(_round_up(batch_tile, _SUBLANE), _SUBLANE)
    grid_b = pl.cdiv(B, cap)
    tb = _round_up(pl.cdiv(B, grid_b), _SUBLANE)
    grid_b = pl.cdiv(B, tb)
    Bp = grid_b * tb

    x_p = x if x.dtype == jnp.float32 else x.astype(jnp.float32)
    if Bp != B:
        # Tail-only zero pad (<= tb-1 rows; typically <= 7 with balanced tiles).
        x_p = jnp.pad(x_p, ((0, Bp - B), (0, 0)))

    # Advisory cost: real (unpadded) work, not padded work.
    cost = pl.CostEstimate(
        flops=2 * B * (F * Hp + Hp * C),
        transcendentals=B * (C + 1),                      # exp per class + log per row
        bytes_accessed=4 * (B * F + B * C + F * Hp + Hp + Hp * C + C),
    )

    out_p = pl.pallas_call(
        _syslog_kernel,
        out_shape=jax.ShapeDtypeStruct((Bp, C), jnp.float32),
        grid_spec=pltpu.PrefetchScalarGridSpec(
            num_scalar_prefetch=0,
            grid=(grid_b,),
            in_specs=[
                pl.BlockSpec((tb, F), lambda i: (i, 0)),    # x tile
                pl.BlockSpec((F, Hp), lambda i: (0, 0)),    # w1 (VMEM-resident)
                pl.BlockSpec((1, Hp), lambda i: (0, 0)),    # b1
                pl.BlockSpec((Hp, C), lambda i: (0, 0)),    # w2 (VMEM-resident)
                pl.BlockSpec((1, C), lambda i: (0, 0)),     # b2
            ],
            out_specs=pl.BlockSpec((tb, C), lambda i: (i, 0)),
        ),
        compiler_params=pltpu.CompilerParams(
            dimension_semantics=("parallel",)),
        cost_estimate=cost,
    )(x_p, w1_p, b1_p, w2_p, b2_p)

    return out_p if Bp == B else out_p[:B]


def init_params(key, num_features, hidden, num_classes):
    """PyTorch-style uniform(-1/sqrt(fan_in), 1/sqrt(fan_in)) init.

    Weights are stored transposed relative to nn.Linear: (in, out).
    """
    k1, k2, k3, k4 = jax.random.split(key, 4)
    bound1 = 1.0 / jnp.sqrt(jnp.float32(num_features))
    bound2 = 1.0 / jnp.sqrt(jnp.float32(hidden))
    w1 = jax.random.uniform(k1, (num_features, hidden), jnp.float32,
                            -bound1, bound1)
    b1 = jax.random.uniform(k2, (hidden,), jnp.float32, -bound1, bound1)
    w2 = jax.random.uniform(k3, (hidden, num_classes), jnp.float32,
                            -bound2, bound2)
    b2 = jax.random.uniform(k4, (num_classes,), jnp.float32, -bound2, bound2)
    return w1, b1, w2, b2


def reference_forward(x, w1, b1, w2, b2):
    h = jnp.maximum(x @ w1 + b1, 0.0)
    z = h @ w2 + b2
    return jax.nn.log_softmax(z, axis=1)


if __name__ == "__main__":
    NUM_FEATURES = 32
    HIDDEN = 10          # matches the PyTorch default HIDDEN=10
    NUM_CLASSES = 4

    key = jax.random.PRNGKey(0)
    kx1, kx2, kp = jax.random.split(key, 3)
    w1, b1, w2, b2 = init_params(kp, NUM_FEATURES, HIDDEN, NUM_CLASSES)
    params = prepare_params(w1, b1, w2, b2)     # pad once, reuse every call

    # Small, non-multiple-of-8 batch: single tile + tail-padding path.
    x_small = jax.random.normal(kx1, (10, NUM_FEATURES), jnp.float32)
    out_small = jax.block_until_ready(syslog_forward(x_small, params))
    ref_small = reference_forward(x_small, w1, b1, w2, b2)
    assert out_small.shape == (10, NUM_CLASSES)
    assert jnp.allclose(out_small, ref_small, atol=1e-5, rtol=1e-5), \
        "small-batch mismatch vs reference"

    # Larger batch: exercises the balanced multi-step grid (3 tiles of 344).
    x_big = jax.random.normal(kx2, (1030, NUM_FEATURES), jnp.float32)
    out_big = jax.block_until_ready(
        syslog_forward(x_big, params, batch_tile=512))
    ref_big = reference_forward(x_big, w1, b1, w2, b2)
    assert out_big.shape == (1030, NUM_CLASSES)
    assert jnp.allclose(out_big, ref_big, atol=1e-5, rtol=1e-5), \
        "large-batch mismatch vs reference"

    print("KERNEL_OK")
</pallas_src>

<mosaic_0001>
module attributes {stable_mosaic.version = 11 : i64} {
  func.func @_syslog_kernel(%arg0: i32, %arg1: memref<16x32xf32, #tpu.memory_space<vmem>>, %arg2: memref<32x128xf32, #tpu.memory_space<vmem>>, %arg3: memref<1x128xf32, #tpu.memory_space<vmem>>, %arg4: memref<128x4xf32, #tpu.memory_space<vmem>>, %arg5: memref<1x4xf32, #tpu.memory_space<vmem>>, %arg6: memref<16x4xf32, #tpu.memory_space<vmem>>) attributes {dimension_semantics = [#tpu.dimension_semantics<parallel>], iteration_bounds = array<i64: 1>, scalar_prefetch = 0 : i64, scratch_operands = 0 : i64, tpu.core_type = #tpu.core_type<tc>, window_params = [{transform_indices = @transform_0, window_bounds = array<i64: 16, 32>}, {pipeline_mode = #tpu.pipeline_mode<synchronous>, transform_indices = @transform_1, window_bounds = array<i64: 32, 128>}, {pipeline_mode = #tpu.pipeline_mode<synchronous>, transform_indices = @transform_2, window_bounds = array<i64: 1, 128>}, {pipeline_mode = #tpu.pipeline_mode<synchronous>, transform_indices = @transform_3, window_bounds = array<i64: 128, 4>}, {pipeline_mode = #tpu.pipeline_mode<synchronous>, transform_indices = @transform_4, window_bounds = array<i64: 1, 4>}, {transform_indices = @transform_5, window_bounds = array<i64: 16, 4>}]} {
    %c0 = arith.constant 0 : index
    %c0_0 = arith.constant 0 : index
    %0 = vector.load %arg1[%c0, %c0_0] : memref<16x32xf32, #tpu.memory_space<vmem>>, vector<16x32xf32>
    %c0_1 = arith.constant 0 : index
    %c0_2 = arith.constant 0 : index
    %1 = vector.load %arg2[%c0_1, %c0_2] : memref<32x128xf32, #tpu.memory_space<vmem>>, vector<32x128xf32>
    %cst = arith.constant dense<0.000000e+00> : vector<16x128xf32>
    %2 = tpu.matmul %0, %1, %cst {dimension_numbers = #tpu.dot_dimension_numbers<[1], [0], [0], [1], [0, 0, 1, 1], [], []>} : vector<16x32xf32>, vector<32x128xf32>, vector<16x128xf32> -> vector<16x128xf32>
    %c0_3 = arith.constant 0 : index
    %c0_4 = arith.constant 0 : index
    %3 = vector.load %arg3[%c0_3, %c0_4] : memref<1x128xf32, #tpu.memory_space<vmem>>, vector<1x128xf32>
    %4 = vector.broadcast %3 : vector<1x128xf32> to vector<16x128xf32>
    %5 = arith.addf %2, %4 : vector<16x128xf32>
    %cst_5 = arith.constant 0.000000e+00 : f32
    %6 = vector.broadcast %cst_5 : f32 to vector<16x128xf32>
    %7 = arith.maximumf %5, %6 : vector<16x128xf32>
    %c0_6 = arith.constant 0 : index
    %c0_7 = arith.constant 0 : index
    %8 = vector.load %arg4[%c0_6, %c0_7] : memref<128x4xf32, #tpu.memory_space<vmem>>, vector<128x4xf32>
    %cst_8 = arith.constant dense<0.000000e+00> : vector<16x4xf32>
    %9 = tpu.matmul %7, %8, %cst_8 {dimension_numbers = #tpu.dot_dimension_numbers<[1], [0], [0], [1], [0, 0, 1, 1], [], []>} : vector<16x128xf32>, vector<128x4xf32>, vector<16x4xf32> -> vector<16x4xf32>
    %c0_9 = arith.constant 0 : index
    %c0_10 = arith.constant 0 : index
    %10 = vector.load %arg5[%c0_9, %c0_10] : memref<1x4xf32, #tpu.memory_space<vmem>>, vector<1x4xf32>
    %11 = vector.broadcast %10 : vector<1x4xf32> to vector<16x4xf32>
    %12 = arith.addf %9, %11 : vector<16x4xf32>
    %cst_11 = arith.constant dense<0xFF800000> : vector<16xf32>
    %13 = vector.multi_reduction <maximumf>, %12, %cst_11 [1] : vector<16x4xf32> to vector<16xf32>
    %14 = vector.shape_cast %13 : vector<16xf32> to vector<16x1xf32>
    %15 = vector.broadcast %14 : vector<16x1xf32> to vector<16x4xf32>
    %16 = arith.subf %12, %15 : vector<16x4xf32>
    %17 = math.exp %16 : vector<16x4xf32>
    %cst_12 = arith.constant dense<0.000000e+00> : vector<16xf32>
    %18 = vector.multi_reduction <add>, %17, %cst_12 [1] : vector<16x4xf32> to vector<16xf32>
    %19 = vector.shape_cast %18 : vector<16xf32> to vector<16x1xf32>
    %20 = math.log %19 : vector<16x1xf32>
    %21 = vector.broadcast %20 : vector<16x1xf32> to vector<16x4xf32>
    %22 = arith.subf %16, %21 : vector<16x4xf32>
    %c0_13 = arith.constant 0 : index
    %c0_14 = arith.constant 0 : index
    %23 = vector.load %arg6[%c0_13, %c0_14] : memref<16x4xf32, #tpu.memory_space<vmem>>, vector<16x4xf32>
    tpu.vector_store %arg6[%c0_13, %c0_14], %22 {strides = array<i32>} : memref<16x4xf32, #tpu.memory_space<vmem>>, vector<16x4xf32>,
    return
  }
  func.func @transform_0(%arg0: i32) -> (i32, i32) {
    %c0_i32 = arith.constant 0 : i32
    %c0_i32_0 = arith.constant 0 : i32
    return %arg0, %c0_i32 : i32, i32
  }
  func.func @transform_1(%arg0: i32) -> (i32, i32) {
    %c0_i32 = arith.constant 0 : i32
    %c0_i32_0 = arith.constant 0 : i32
    %c0_i32_1 = arith.constant 0 : i32
    return %c0_i32, %c0_i32_0 : i32, i32
  }
  func.func @transform_2(%arg0: i32) -> (i32, i32) {
    %c0_i32 = arith.constant 0 : i32
    %c0_i32_0 = arith.constant 0 : i32
    %c0_i32_1 = arith.constant 0 : i32
    return %c0_i32, %c0_i32_0 : i32, i32
  }
  func.func @transform_3(%arg0: i32) -> (i32, i32) {
    %c0_i32 = arith.constant 0 : i32
    %c0_i32_0 = arith.constant 0 : i32
    %c0_i32_1 = arith.constant 0 : i32
    return %c0_i32, %c0_i32_0 : i32, i32
  }
  func.func @transform_4(%arg0: i32) -> (i32, i32) {
    %c0_i32 = arith.constant 0 : i32
    %c0_i32_0 = arith.constant 0 : i32
    %c0_i32_1 = arith.constant 0 : i32
    return %c0_i32, %c0_i32_0 : i32, i32
  }
  func.func @transform_5(%arg0: i32) -> (i32, i32) {
    %c0_i32 = arith.constant 0 : i32
    %c0_i32_0 = arith.constant 0 : i32
    return %arg0, %c0_i32 : i32, i32
  }
}

</mosaic_0001>

<llo_original>
// kernel: tpu_custom_call.1
$region0: #{tpu_custom_call.1}
  #allocation0 [shape = 'u32[]', space=smem, size = 0x4, offset = 0x4, fixed_abs, tag = 'smem constant byte address 0x4 - core index']
  #allocation1 [shape = 'u32[144,128]{1,0:T(1,128)}', space=vmem, size = 0x12000, scoped, tag = 'internal scratch']
  %s0 = inlined_call_operand.vmem [shape: f32[16,32], index: 0, kind: input, shape index: {}]
  %s1 = inlined_call_operand.vmem [shape: f32[32,128], index: 1, kind: input, shape index: {}]
  %s2 = inlined_call_operand.vmem [shape: f32[1,128], index: 2, kind: input, shape index: {}]
  %s3 = inlined_call_operand.vmem [shape: f32[128,4], index: 3, kind: input, shape index: {}]
  %s4 = inlined_call_operand.vmem [shape: f32[1,4], index: 4, kind: input, shape index: {}]
  %s5 = inlined_call_operand.vmem [shape: f32[16,4], index: 5, kind: output, shape index: {}]
  %s6 = sld [smem:[#allocation0]]
  $region30: #{tpu_custom_call.1} parent=0
    _
  %s8 = ssub.s32 1, %s6
  %s9 = scalar_select 0, %s8, %s6
  // Predicated region
  $region2: #{tpu_custom_call.1} parent=0 // pred_check
    _
  $region3: #{tpu_custom_call.1} parent=0 // pred_check_branch
    %11 = sbr.rel (0) target = $region5
  $region4: #{tpu_custom_call.1} parent=0 // pred_region
    _
  $region5: #{tpu_custom_call.1} parent=0 // pred_fallthru
    _
  // Predicated region
  $region6: #{tpu_custom_call.1} parent=0 // pred_check
    _
  $region7: #{tpu_custom_call.1} parent=0 // pred_check_branch
    %13 = sbr.rel (0) target = $region9
  $region8: #{tpu_custom_call.1} parent=0 // pred_region
    _
  $region9: #{tpu_custom_call.1} parent=0 // pred_fallthru
    _
  // Predicated region
  $region10: #{tpu_custom_call.1} parent=0 // pred_check
    _
  $region11: #{tpu_custom_call.1} parent=0 // pred_check_branch
    %15 = sbr.rel (0) target = $region13
  $region12: #{tpu_custom_call.1} parent=0 // pred_region
    _
  $region13: #{tpu_custom_call.1} parent=0 // pred_fallthru
    _
  // Predicated region
  $region14: #{tpu_custom_call.1} parent=0 // pred_check
    _
  $region15: #{tpu_custom_call.1} parent=0 // pred_check_branch
    %17 = sbr.rel (0) target = $region17
  $region16: #{tpu_custom_call.1} parent=0 // pred_region
    _
  $region17: #{tpu_custom_call.1} parent=0 // pred_fallthru
    _
  // Predicated region
  $region18: #{tpu_custom_call.1} parent=0 // pred_check
    _
  $region19: #{tpu_custom_call.1} parent=0 // pred_check_branch
    %19 = sbr.rel (0) target = $region21
  $region20: #{tpu_custom_call.1} parent=0 // pred_region
    _
  $region21: #{tpu_custom_call.1} parent=0 // pred_fallthru
    _
  %v20 = vld [vmem:[%s0] sm:$0xff]
  %v21 = vld [vmem:[%s0 + $0x8] sm:$0xff]
  %v22 = vld [vmem:[%s1] sm:$0xff]
  %v23 = vld [vmem:[%s1 + $0x8] sm:$0xff]
  %v24 = vld [vmem:[%s1 + $0x10] sm:$0xff]
  %v25 = vld [vmem:[%s1 + $0x18] sm:$0xff]
  %v26 = vld [vmem:[%s2] sm:$0x1]
  %v28 = vlaneseq
  %v29 = vshrl.u32 %v28, 7
  %v30 = vsub.s32 0, %v29
  %v31 = vrot.slane %v26, %v30
  %vm33 = vcmask 261120
  %v35 = vsel %vm33, %v20, 0
  %v38 = vsel %vm33, %v21, 0
  %40 = vmatprep.subr.mxu0 0.0
  %41 = vmatpush1.msra.mxu0 %v22
  %42 = vmatprep.subr.mxu0 0.0
  %43 = vmatpush1.msra.mxu0 %v23
  %44 = vmatprep.subr.mxu0 0.0
  %45 = vmatpush1.msra.mxu0 %v24
  %46 = vmatprep.subr.mxu0 0.0
  %47 = vmatpush1.msra.mxu0 %v25
  %48 = vmatprep.subr.mxu0 0.0
  %49 = vmatpush1.msra.mxu0 0.0
  %50 = vmatprep.subr.mxu0 0.0
  %51 = vmatpush1.msra.mxu0 0.0
  %52 = vmatprep.subr.mxu0 0.0
  %53 = vmatpush1.msra.mxu0 0.0
  %54 = vmatprep.subr.mxu0 0.0
  %55 = vmatpush1.msra.mxu0 0.0
  %56 = vmatprep.subr.mxu0 0.0
  %57 = vmatpush1.msra.mxu0 0.0
  %58 = vmatprep.subr.mxu0 0.0
  %59 = vmatpush1.msra.mxu0 0.0
  %60 = vmatprep.subr.mxu0 0.0
  %61 = vmatpush1.msra.mxu0 0.0
  %62 = vmatprep.subr.mxu0 0.0
  %63 = vmatpush1.msra.mxu0 0.0
  %64 = vmatprep.subr.mxu0 0.0
  %65 = vmatpush1.msra.mxu0 0.0
  %66 = vmatprep.subr.mxu0 0.0
  %67 = vmatpush1.msra.mxu0 0.0
  %68 = vmatprep.subr.mxu0 0.0
  %69 = vmatpush1.msra.mxu0 0.0
  %70 = vmatprep.subr.mxu0 0.0
  %71 = vmatpush1.msra.mxu0 0.0
  %72 = vmatprep.subr.mxu0 0.0
  %73 = vmatpush1.msra.mxu0 0.0
  %74 = vmatprep.subr.mxu0 0.0
  %75 = vmatpush1.msra.mxu0 0.0
  %76 = vmatprep.subr.mxu0 0.0
  %77 = vmatpush1.msra.mxu0 0.0
  %78 = vmatprep.subr.mxu0 0.0
  %79 = vmatpush1.msra.mxu0 0.0
  %80 = vmatprep.subr.mxu0 0.0
  %81 = vmatpush1.msra.mxu0 0.0
  %82 = vmatprep.subr.mxu0 0.0
  %83 = vmatpush1.msra.mxu0 0.0
  %84 = vmatprep.subr.mxu0 0.0
  %85 = vmatpush1.msra.mxu0 0.0
  %86 = vmatprep.subr.mxu0 0.0
  %87 = vmatpush1.msra.mxu0 0.0
  %88 = vmatprep.subr.mxu0 0.0
  %89 = vmatpush1.msra.mxu0 0.0
  %90 = vmatprep.subr.mxu0 0.0
  %91 = vmatpush1.msra.mxu0 0.0
  %92 = vmatprep.subr.mxu0 0.0
  %93 = vmatpush1.msra.mxu0 0.0
  %94 = vmatprep.subr.mxu0 0.0
  %95 = vmatpush1.msra.mxu0 0.0
  %96 = vmatprep.subr.mxu0 0.0
  %97 = vmatpush1.msra.mxu0 0.0
  %98 = vmatprep.subr.mxu0 0.0
  %99 = vmatpush1.msra.mxu0 0.0
  %100 = vmatprep.subr.mxu0 0.0
  %101 = vmatpush1.msra.mxu0 0.0
  %102 = vmatprep.subr.mxu0 0.0
  %103 = vmatpush1.msra.mxu0 0.0
  %104 = vmatprep.mubr.f32.mxu0 0.0
  %105 = vmatmul.mubr.f32.gmra.mrb[0].mxu0 %v35
  %v106 = vpop.f32.mrb[0].mxu0
  %v107 = vadd.f32 %v31, %v106
  %v108 = vpop.f32.mrb[0].mxu0
  %109 = vmatprep.mubr.f32.mxu0 0.0
  %110 = vmatmul.mubr.f32.gmra.mrb[0].mxu0 %v38
  %v111 = vpop.f32.mrb[0].mxu0
  %v112 = vadd.f32 %v31, %v111
  %v113 = vpop.f32.mrb[0].mxu0
  %114 = vdwg.mxu0
  %v115 = vmax.f32 %v107, 0.0
  %v116 = vmax.f32 %v112, 0.0
  %v117 = vld [vmem:[%s3] sm:$0xff]
  %v118 = vld [vmem:[%s3 + $0x8] sm:$0xff]
  %v119 = vld [vmem:[%s3 + $0x10] sm:$0xff]
  %v120 = vld [vmem:[%s3 + $0x18] sm:$0xff]
  %v121 = vld [vmem:[%s3 + $0x20] sm:$0xff]
  %v122 = vld [vmem:[%s3 + $0x28] sm:$0xff]
  %v123 = vld [vmem:[%s3 + $0x30] sm:$0xff]
  %v124 = vld [vmem:[%s3 + $0x38] sm:$0xff]
  %v125 = vld [vmem:[%s3 + $0x40] sm:$0xff]
  %v126 = vld [vmem:[%s3 + $0x48] sm:$0xff]
  %v127 = vld [vmem:[%s3 + $0x50] sm:$0xff]
  %v128 = vld [vmem:[%s3 + $0x58] sm:$0xff]
  %v129 = vld [vmem:[%s3 + $0x60] sm:$0xff]
  %v130 = vld [vmem:[%s3 + $0x68] sm:$0xff]
  %v131 = vld [vmem:[%s3 + $0x70] sm:$0xff]
  %v132 = vld [vmem:[%s3 + $0x78] sm:$0xff]
  %v133 = vld [vmem:[%s4] sm:$0x1]
  %v135 = vlaneseq
  %v136 = vshrl.u32 %v135, 7
  %v137 = vsub.s32 0, %v136
  %v138 = vrot.slane %v133, %v137
  %140 = vmatprep.subr.mxu0 0.0
  %141 = vmatpush1.msra.mxu0 %v117
  %142 = vmatprep.subr.mxu0 0.0
  %143 = vmatpush1.msra.mxu0 %v118
  %144 = vmatprep.subr.mxu0 0.0
  %145 = vmatpush1.msra.mxu0 %v119
  %146 = vmatprep.subr.mxu0 0.0
  %147 = vmatpush1.msra.mxu0 %v120
  %148 = vmatprep.subr.mxu0 0.0
  %149 = vmatpush1.msra.mxu0 %v121
  %150 = vmatprep.subr.mxu0 0.0
  %151 = vmatpush1.msra.mxu0 %v122
  %152 = vmatprep.subr.mxu0 0.0
  %153 = vmatpush1.msra.mxu0 %v123
  %154 = vmatprep.subr.mxu0 0.0
  %155 = vmatpush1.msra.mxu0 %v124
  %156 = vmatprep.subr.mxu0 0.0
  %157 = vmatpush1.msra.mxu0 %v125
  %158 = vmatprep.subr.mxu0 0.0
  %159 = vmatpush1.msra.mxu0 %v126
  %160 = vmatprep.subr.mxu0 0.0
  %161 = vmatpush1.msra.mxu0 %v127
  %162 = vmatprep.subr.mxu0 0.0
  %163 = vmatpush1.msra.mxu0 %v128
  %164 = vmatprep.subr.mxu0 0.0
  %165 = vmatpush1.msra.mxu0 %v129
  %166 = vmatprep.subr.mxu0 0.0
  %167 = vmatpush1.msra.mxu0 %v130
  %168 = vmatprep.subr.mxu0 0.0
  %169 = vmatpush1.msra.mxu0 %v131
  %170 = vmatprep.subr.mxu0 0.0
  %171 = vmatpush1.msra.mxu0 %v132
  %172 = vmatprep.subr.mxu0 0.0
  %173 = vmatpush1.msra.mxu0 0.0
  %174 = vmatprep.subr.mxu0 0.0
  %175 = vmatpush1.msra.mxu0 0.0
  %176 = vmatprep.subr.mxu0 0.0
  %177 = vmatpush1.msra.mxu0 0.0
  %178 = vmatprep.subr.mxu0 0.0
  %179 = vmatpush1.msra.mxu0 0.0
  %180 = vmatprep.subr.mxu0 0.0
  %181 = vmatpush1.msra.mxu0 0.0
  %182 = vmatprep.subr.mxu0 0.0
  %183 = vmatpush1.msra.mxu0 0.0
  %184 = vmatprep.subr.mxu0 0.0
  %185 = vmatpush1.msra.mxu0 0.0
  %186 = vmatprep.subr.mxu0 0.0
  %187 = vmatpush1.msra.mxu0 0.0
  %188 = vmatprep.subr.mxu0 0.0
  %189 = vmatpush1.msra.mxu0 0.0
  %190 = vmatprep.subr.mxu0 0.0
  %191 = vmatpush1.msra.mxu0 0.0
  %192 = vmatprep.subr.mxu0 0.0
  %193 = vmatpush1.msra.mxu0 0.0
  %194 = vmatprep.subr.mxu0 0.0
  %195 = vmatpush1.msra.mxu0 0.0
  %196 = vmatprep.subr.mxu0 0.0
  %197 = vmatpush1.msra.mxu0 0.0
  %198 = vmatprep.subr.mxu0 0.0
  %199 = vmatpush1.msra.mxu0 0.0
  %200 = vmatprep.subr.mxu0 0.0
  %201 = vmatpush1.msra.mxu0 0.0
  %202 = vmatprep.subr.mxu0 0.0
  %203 = vmatpush1.msra.mxu0 0.0
  %204 = vmatprep.mubr.f32.mxu0 0.0
  %205 = vmatmul.mubr.f32.gmra.mrb[0].mxu0 %v115
  %v206 = vpop.f32.mrb[0].mxu0
  %v207 = vadd.f32 %v138, %v206
  %v208 = vpop.f32.mrb[0].mxu0
  %209 = vmatprep.mubr.f32.mxu0 0.0
  %210 = vmatmul.mubr.f32.gmra.mrb[0].mxu0 %v116
  %v211 = vpop.f32.mrb[0].mxu0
  %v212 = vadd.f32 %v138, %v211
  %v213 = vpop.f32.mrb[0].mxu0
  %214 = vdwg.mxu0
  %vm215 = vcmask 31744
  %v216 = vsel %vm215, %v207, -inf
  %217 = vmax.xlane.f32.xlu0 %v216
  %v218 = vpop.xlane.xlu0 %217
  %v219 = vsel %vm215, %v212, -inf
  %220 = vmax.xlane.f32.xlu0 %v219
  %v221 = vpop.xlane.xlu0 %220
  %v222 = vsub.f32 %v207, %v218
  %v223 = vsub.f32 %v212, %v221
  %v224 = vmul.f32 %v222, 1.442695
  %v225 = vpow.pop %v224
  %v226 = vmul.f32 %v223, 1.442695
  %v227 = vpow.pop %v226
  %v228 = vsel %vm215, %v225, 0.0
  %229 = vadd.xlane.f32.xlu0 %v228
  %v230 = vpop.xlane.xlu0 %229
  %v231 = vsel %vm215, %v227, 0.0
  %232 = vadd.xlane.f32.xlu0 %v231
  %v233 = vpop.xlane.xlu0 %232
  %v234 = vlog2.pop %v230
  %v235 = vmul.f32 %v234, 0.6931472
  %v236 = vlog2.pop %v233
  %v237 = vmul.f32 %v236, 0.6931472
  %v238 = vsub.f32 %v222, %v235
  %v239 = vsub.f32 %v223, %v237
  %240 = vst.msk [vmem:[%s5] sm:$0xff] %vm215, %v238
  %241 = vst.msk [vmem:[%s5 + $0x8] sm:$0xff] %vm215, %v239
  // Predicated region
  $region22: #{tpu_custom_call.1} parent=0 // pred_check
    _
  $region23: #{tpu_custom_call.1} parent=0 // pred_check_branch
    %243 = sbr.rel (0) target = $region25
  $region24: #{tpu_custom_call.1} parent=0 // pred_region
    _
  $region25: #{tpu_custom_call.1} parent=0 // pred_fallthru
    _
  // Predicated region
  $region26: #{tpu_custom_call.1} parent=0 // pred_check
    _
  $region27: #{tpu_custom_call.1} parent=0 // pred_check_branch
    %245 = sbr.rel (0) target = $region29
  $region28: #{tpu_custom_call.1} parent=0 // pred_region
    _
  $region29: #{tpu_custom_call.1} parent=0 // pred_fallthru
    _

</llo_original>
